<compile_context>
chip_gen: v7x
topology: tpu7x:2x2x1
jax: 0.10.0
libtpu: 0.0.40
codegen_flags: <defaults>
</compile_context>

<pallas_src>
import jax
import jax.numpy as jnp
from jax.experimental import pallas as pl
from jax.experimental.pallas import tpu as pltpu


_NEG = -1.0e30            # finite "masked" sentinel for the running max (f32)
_PAD_KS = 1_000_000_000   # kernel-size sentinel for padded output columns


def _round_up(v, m):
    return (v + m - 1) // m * m


def _make_kernel(K, Koff, TL, C, L, rem):
    """Kernel factory.

    K    : max kernel width (every branch's weights zero-padded to K taps)
    Koff : halo rows carried between L chunks (K-1 rounded up to 8)
    TL   : rows per L chunk
    C    : input channels
    L    : true sequence length
    rem  : L % TL (0 -> the last chunk has no out-of-bounds tail rows)
    """

    def kernel(x_ref, w_ref, b_ref, ks_ref, o_ref, xw_ref, xcol_ref, mx_ref):
        # x_ref   : (TB, TL, C)        chunk c = nl-1-s of x (reverse L order)
        # w_ref   : (K*C, OCp)         fused im2col weights (compute dtype)
        # b_ref   : (1, OCp)  f32      fused bias (0 on pad columns)
        # ks_ref  : (1, OCp)  i32      kernel size per output column (pad=huge)
        # o_ref   : (TB, OCp)          fused output (written on the last step)
        # xw_ref  : (TB, TL+Koff, C)   chunk + lookahead halo     (VMEM scratch)
        # xcol_ref: (TB, TL, K*C)      im2col of the window       (VMEM scratch)
        # mx_ref  : (TB, OCp) f32      running max over positions (VMEM scratch)
        s = pl.program_id(1)
        nl = pl.num_programs(1)
        c = nl - 1 - s                    # chunk index in natural (ascending) order
        TB = x_ref.shape[0]
        OCp = o_ref.shape[1]

        @pl.when(s == 0)
        def _init():
            mx_ref[...] = jnp.full(mx_ref.shape, _NEG, mx_ref.dtype)
            # Halo of the LAST chunk corresponds to rows >= L -> zeros, so the
            # zero-padded taps of shorter branches only ever touch finite data.
            xw_ref[:, TL:, :] = jnp.zeros((TB, Koff, C), xw_ref.dtype)

        # ---- stage the current chunk into the window (cast to compute dtype).
        #      Only the last chunk (processed at s == 0) can contain rows >= L;
        #      zero those rows so garbage never feeds the matmul.
        if rem:
            @pl.when(s == 0)
            def _store_tail_masked():
                row = jax.lax.broadcasted_iota(jnp.int32, (TL, 1), 0)
                ok = (c * TL + row) < L           # c == nl - 1 here
                xw_ref[:, :TL, :] = jnp.where(
                    ok[None], x_ref[...], 0).astype(xw_ref.dtype)

            @pl.when(s > 0)
            def _store_plain():
                xw_ref[:, :TL, :] = x_ref[...].astype(xw_ref.dtype)
        else:
            xw_ref[:, :TL, :] = x_ref[...].astype(xw_ref.dtype)

        # ---- im2col: tap k of the window -> lanes [k*C, (k+1)*C).
        #      (Sublane-misaligned tap slices are paid ONCE here instead of once
        #       per matmul operand.)
        for k in range(K):
            xcol_ref[:, :, k * C:(k + 1) * C] = xw_ref[:, k:k + TL, :]

        # ---- carry: the first Koff rows of this chunk are the next (earlier)
        #      chunk's lookahead halo.  8-aligned sublane copy.
        xw_ref[:, TL:, :] = xw_ref[:, :Koff, :]

        # ---- all branches in ONE K*C-deep MXU contraction, f32 accumulation.
        acc = jax.lax.dot_general(
            xcol_ref[...], w_ref[...],
            dimension_numbers=(((2,), (0,)), ((), ())),
            preferred_element_type=jnp.float32)            # (TB, TL, OCp)

        # ---- running max over conv positions.  Only chunks overlapping
        #      (L - K, L) need the per-column validity mask (t <= L - ks_i);
        #      interior chunks skip the full-size select entirely.
        need_mask = (c + 1) * TL > (L - K + 1)

        @pl.when(need_mask)
        def _masked_max():
            t = c * TL + jax.lax.broadcasted_iota(jnp.int32, (TL, OCp), 0)
            valid = (t + ks_ref[...]) <= L
            mx_ref[...] = jnp.maximum(
                mx_ref[...],
                jnp.max(jnp.where(valid[None], acc, _NEG), axis=1))

        @pl.when(jnp.logical_not(need_mask))
        def _plain_max():
            mx_ref[...] = jnp.maximum(mx_ref[...], jnp.max(acc, axis=1))

        @pl.when(s == nl - 1)
        def _finalize():
            # bias + relu AFTER the max: ReLU is monotone and the bias is
            # constant over positions -> exactly equivalent to the reference.
            o_ref[...] = jnp.maximum(
                mx_ref[...] + b_ref[...], 0.0).astype(o_ref.dtype)

    return kernel


def conv_maxpool_fused(x, w2, b_fused, ks_col, *, max_ks,
                       tb=None, tl=None,
                       vmem_budget_bytes=40 * 1024 * 1024):
    """Fused multi-branch Conv1d(+bias) -> relu -> global max -> concat.

    x      : (B, L, C)
    w2     : (max_ks * C, OCp) fused im2col weights (compute dtype = w2.dtype)
    b_fused: (1, OCp) float32
    ks_col : (1, OCp) int32 kernel size per output column (pad columns = huge)
    Returns the padded (B, OCp) slab; slice [:, :OC] for the module output.
    """
    B, L, C = (int(d) for d in x.shape)
    K = int(max_ks)
    KC, OCp = (int(d) for d in w2.shape)
    assert KC == K * C, (KC, K, C)
    if L < K:
        raise ValueError("sequence length must be >= every kernel size")

    cdt = w2.dtype
    cbytes = jnp.dtype(cdt).itemsize
    xbytes = jnp.dtype(x.dtype).itemsize
    Koff = _round_up(max(K - 1, 1), 8)

    # ---------------- tile selection ----------------
    # Batch tile: the whole of B when small; otherwise a multiple of 8 and at
    # least 2 tiles once B >= 16 so the "parallel" batch axis can shard across
    # v7x's two TensorCores.
    if tb is None:
        tb = 64 if B < 16 else min(64, _round_up(int(pl.cdiv(B, 2)), 8))
    tb = int(tb)
    if tb >= B:
        tb = B
    elif tb % 8:
        tb = _round_up(tb, 8)

    # Length tile: big chunks amortize the ~0.35us per-grid-step overhead and
    # keep the HBM DMA near roofline; floored at the halo size.
    if tl is None:
        tl = 512
    tl = max(Koff, 8, _round_up(min(int(tl), _round_up(L, 8)), 8))

    def _footprint(tb_, tl_):
        return (2 * tb_ * tl_ * C * xbytes          # x block (double-buffered)
                + 2 * KC * OCp * cbytes             # fused weights
                + tb_ * (tl_ + Koff) * C * cbytes   # window scratch
                + tb_ * tl_ * KC * cbytes           # im2col scratch
                + tb_ * OCp * 4                     # running max
                + 2 * tb_ * OCp * xbytes            # output block
                + 4 * OCp * 8)                      # bias / ks vectors

    # Shrink tiles until the footprint fits the budget (sized for v7x's 64 MiB
    # physical VMEM; v5e/v6e have 128 MiB so this is conservative there).
    while _footprint(tb, tl) > vmem_budget_bytes and tl > max(Koff, 8):
        tl = max(Koff, 8, _round_up(tl // 2, 8))
    while _footprint(tb, tl) > vmem_budget_bytes and tb > 8:
        tb = max(8, _round_up(tb // 2, 8))

    n_b = int(pl.cdiv(B, tb))
    n_l = int(pl.cdiv(L, tl))
    rem = L % tl

    kernel = _make_kernel(K, Koff, tl, C, L, rem)

    cost = pl.CostEstimate(
        flops=2 * B * L * KC * OCp,
        transcendentals=0,
        bytes_accessed=B * L * C * xbytes + KC * OCp * cbytes + B * OCp * xbytes)

    vmem_limit = int(min(max(_footprint(tb, tl) * 5 // 4, 32 * 1024 * 1024),
                         64 * 1024 * 1024))

    out = pl.pallas_call(
        kernel,
        out_shape=jax.ShapeDtypeStruct((B, OCp), x.dtype),
        grid=(n_b, n_l),
        in_specs=[
            # L chunks visited in REVERSE so each chunk's lookahead halo was
            # loaded one step earlier and can be carried in VMEM.
            pl.BlockSpec((tb, tl, C), lambda bi, li: (bi, n_l - 1 - li, 0)),
            # Constant-index blocks are fetched once and stay resident.
            # TODO(synk): pipeline_mode=pl.Buffered(1) on these would drop their
            # redundant second buffer and free VMEM headroom on v7x.
            pl.BlockSpec((KC, OCp), lambda bi, li: (0, 0)),
            pl.BlockSpec((1, OCp), lambda bi, li: (0, 0)),
            pl.BlockSpec((1, OCp), lambda bi, li: (0, 0)),
        ],
        out_specs=pl.BlockSpec((tb, OCp), lambda bi, li: (bi, 0)),
        scratch_shapes=[
            pltpu.VMEM((tb, tl + Koff, C), cdt),    # window (chunk + halo)
            pltpu.VMEM((tb, tl, KC), cdt),          # im2col slab
            pltpu.VMEM((tb, OCp), jnp.float32),     # running max over L
        ],
        compiler_params=pltpu.CompilerParams(
            dimension_semantics=("parallel", "arbitrary"),
            vmem_limit_bytes=vmem_limit),
        cost_estimate=cost,
    )(x, w2, b_fused, ks_col)
    return out


def fuse_conv_params(weights, biases):
    """Pack per-branch conv weights into the fused im2col layout (done once).

    weights: list of (ks_i, C, oc_i) float arrays; biases: list of (oc_i,).
    Returns (w2_f32 (K*C, OCp), b (1, OCp) f32, ks_col (1, OCp) i32, K, OC).
    """
    ks_list = [int(w.shape[0]) for w in weights]
    oc_list = [int(w.shape[2]) for w in weights]
    C = int(weights[0].shape[1])
    assert all(int(w.shape[1]) == C for w in weights)
    K = max(ks_list)
    OC = sum(oc_list)
    OCp = _round_up(OC, 128)                       # lane-dense output slab

    w_fused = jnp.zeros((K, C, OCp), jnp.float32)
    b_fused = jnp.zeros((1, OCp), jnp.float32)
    ks_col = jnp.full((1, OCp), _PAD_KS, jnp.int32)   # pad columns: never valid
    col = 0
    for w, b, ks, oc in zip(weights, biases, ks_list, oc_list):
        w_fused = w_fused.at[:ks, :, col:col + oc].set(w.astype(jnp.float32))
        b_fused = b_fused.at[0, col:col + oc].set(b.astype(jnp.float32))
        ks_col = ks_col.at[0, col:col + oc].set(ks)
        col += oc
    return w_fused.reshape(K * C, OCp), b_fused, ks_col, K, OC


class ConvMaxpoolPallas:
    """JAX/Pallas re-implementation of fastNLP ConvMaxpool (relu activation).

    Weight/bias/kernel-size fusion happens ONCE here, not per forward call.
    compute_dtype=bfloat16 (default) runs the MXU at native bf16 rate on
    v5e/v6e/v7x; the conv accumulation and the bias+relu epilogue stay float32.
    """

    def __init__(self, in_channels, out_channels, kernel_sizes, key,
                 compute_dtype=jnp.bfloat16):
        if isinstance(kernel_sizes, int):
            out_channels = [out_channels]
            kernel_sizes = [kernel_sizes]
        self.weights, self.biases = [], []
        for oc, ks in zip(out_channels, kernel_sizes):
            key, kw, kb = jax.random.split(key, 3)
            # PyTorch Conv1d default init: U(-1/sqrt(C*ks), 1/sqrt(C*ks)),
            # weight layout (oc, C, ks) -> re-laid-out once to (ks, C, oc).
            bound = 1.0 / (in_channels * ks) ** 0.5
            w_t = jax.random.uniform(kw, (oc, in_channels, ks), jnp.float32,
                                     -bound, bound)
            self.weights.append(jnp.transpose(w_t, (2, 1, 0)))
            self.biases.append(
                jax.random.uniform(kb, (oc,), jnp.float32, -bound, bound))
        (self._w2_f32, self.b_fused, self.ks_col,
         self.max_ks, self.out_features) = fuse_conv_params(self.weights,
                                                            self.biases)
        self.w2 = self._w2_f32.astype(compute_dtype)

    def __call__(self, x, *, tb=None, tl=None, compute_dtype=None):
        w2 = self.w2
        if compute_dtype is not None and jnp.dtype(compute_dtype) != w2.dtype:
            w2 = self._w2_f32.astype(compute_dtype)   # off-default path only
        out = conv_maxpool_fused(x, w2, self.b_fused, self.ks_col,
                                 max_ks=self.max_ks, tb=tb, tl=tl)
        return out[:, :self.out_features]


def _reference(x, weights, biases):
    """Pure-JAX f32 reference (PyTorch ConvMaxpool semantics)."""
    outs = []
    for w, b in zip(weights, biases):
        ks = w.shape[0]
        L = x.shape[1]
        L_out = L - ks + 1
        acc = jnp.zeros((x.shape[0], L_out, w.shape[2]), jnp.float32)
        for k in range(ks):
            acc = acc + jnp.einsum('blc,co->blo', x[:, k:k + L_out, :], w[k],
                                   precision=jax.lax.Precision.HIGHEST)
        acc = jax.nn.relu(acc + b[None, None, :])
        outs.append(jnp.max(acc, axis=1))
    return jnp.concatenate(outs, axis=-1)


if __name__ == "__main__":
    key = jax.random.PRNGKey(0)
    k_x, k_p, k_x2, k_p2 = jax.random.split(key, 4)

    # Case 1: B=2, L=16, C=8, branches (16 @ ks=3, 16 @ ks=5).
    B, L, C_in = 2, 16, 8
    out_channels, kernel_sizes = (16, 16), (3, 5)
    x = jax.random.normal(k_x, (B, L, C_in), jnp.float32)
    mod = ConvMaxpoolPallas(C_in, list(out_channels), list(kernel_sizes), k_p)
    ref = _reference(x, mod.weights, mod.biases)

    # f32 compute: tight-ish tolerance (covers MXU f32 pass decomposition).
    # tl=8 forces two L chunks and exercises the reverse-order halo carry and
    # the gated boundary masking.
    for tl in (None, 8):
        out = jax.block_until_ready(mod(x, tl=tl, compute_dtype=jnp.float32))
        assert out.shape == (B, sum(out_channels)), out.shape
        assert jnp.allclose(out, ref, atol=1e-2, rtol=1e-2), f"f32 mismatch tl={tl}"

    # Default bf16 compute: looser tolerance (bf16 inputs/weights, f32 accum).
    out_bf16 = jax.block_until_ready(mod(x))
    assert out_bf16.shape == (B, sum(out_channels))
    assert jnp.allclose(out_bf16, ref, atol=0.1, rtol=0.1), "bf16 mismatch"

    # Case 2: odd L (in-kernel tail-row masking) and odd B (partial batch tile).
    B2, L2, C2 = 3, 13, 8
    x2 = jax.random.normal(k_x2, (B2, L2, C2), jnp.float32)
    mod2 = ConvMaxpoolPallas(C2, [8, 8], [2, 4], k_p2)
    ref2 = _reference(x2, mod2.weights, mod2.biases)
    out2 = jax.block_until_ready(mod2(x2, compute_dtype=jnp.float32))
    assert out2.shape == (B2, 16), out2.shape
    assert jnp.allclose(out2, ref2, atol=1e-2, rtol=1e-2), "case-2 mismatch"

    print("KERNEL_OK")
</pallas_src>

<mosaic_0001>
module attributes {stable_mosaic.version = 11 : i64} {
  func.func @kernel(%arg0: i32, %arg1: i32, %arg2: memref<2x16x8xf32, #tpu.memory_space<vmem>>, %arg3: memref<40x128xf32, #tpu.memory_space<vmem>>, %arg4: memref<1x128xf32, #tpu.memory_space<vmem>>, %arg5: memref<1x128xi32, #tpu.memory_space<vmem>>, %arg6: memref<2x128xf32, #tpu.memory_space<vmem>>, %arg7: memref<2x24x8xf32, #tpu.memory_space<vmem>>, %arg8: memref<2x16x40xf32, #tpu.memory_space<vmem>>, %arg9: memref<2x128xf32, #tpu.memory_space<vmem>>) attributes {dimension_semantics = [#tpu.dimension_semantics<parallel>, #tpu.dimension_semantics<arbitrary>], iteration_bounds = array<i64: 1, 1>, scalar_prefetch = 0 : i64, scratch_operands = 3 : i64, tpu.core_type = #tpu.core_type<tc>, window_params = [{transform_indices = @transform_0, window_bounds = array<i64: 2, 16, 8>}, {pipeline_mode = #tpu.pipeline_mode<synchronous>, transform_indices = @transform_1, window_bounds = array<i64: 40, 128>}, {pipeline_mode = #tpu.pipeline_mode<synchronous>, transform_indices = @transform_2, window_bounds = array<i64: 1, 128>}, {pipeline_mode = #tpu.pipeline_mode<synchronous>, transform_indices = @transform_3, window_bounds = array<i64: 1, 128>}, {transform_indices = @transform_4, window_bounds = array<i64: 2, 128>}]} {
    %c0_i32 = arith.constant 0 : i32
    %0 = arith.subi %c0_i32, %arg1 : i32
    %c0_i32_0 = arith.constant 0 : i32
    %1 = arith.cmpi eq, %arg1, %c0_i32_0 : i32
    %2 = arith.extui %1 : i1 to i32
    %c0_i32_1 = arith.constant 0 : i32
    %3 = arith.cmpi ne, %2, %c0_i32_1 : i32
    scf.if %3 {
      %cst_44 = arith.constant -1.000000e+30 : f32
      %32 = vector.broadcast %cst_44 : f32 to vector<2x128xf32>
      %c0_45 = arith.constant 0 : index
      %c0_46 = arith.constant 0 : index
      %33 = vector.load %arg9[%c0_45, %c0_46] : memref<2x128xf32, #tpu.memory_space<vmem>>, vector<2x128xf32>
      tpu.vector_store %arg9[%c0_45, %c0_46], %32 {strides = array<i32>} : memref<2x128xf32, #tpu.memory_space<vmem>>, vector<2x128xf32>,
      %cst_47 = arith.constant 0.000000e+00 : f32
      %34 = vector.broadcast %cst_47 : f32 to vector<2x8x8xf32>
      %c0_48 = arith.constant 0 : index
      %c16_49 = arith.constant 16 : index
      %c0_50 = arith.constant 0 : index
      %35 = vector.load %arg7[%c0_48, %c16_49, %c0_50] : memref<2x24x8xf32, #tpu.memory_space<vmem>>, vector<2x8x8xf32>
      tpu.vector_store %arg7[%c0_48, %c16_49, %c0_50], %34 {strides = array<i32>} : memref<2x24x8xf32, #tpu.memory_space<vmem>>, vector<2x8x8xf32>,
    } else {
    }
    %c0 = arith.constant 0 : index
    %c0_2 = arith.constant 0 : index
    %c0_3 = arith.constant 0 : index
    %4 = vector.load %arg2[%c0, %c0_2, %c0_3] : memref<2x16x8xf32, #tpu.memory_space<vmem>>, vector<2x16x8xf32>
    %c0_4 = arith.constant 0 : index
    %c0_5 = arith.constant 0 : index
    %c0_6 = arith.constant 0 : index
    %5 = vector.load %arg7[%c0_4, %c0_5, %c0_6] : memref<2x24x8xf32, #tpu.memory_space<vmem>>, vector<2x16x8xf32>
    tpu.vector_store %arg7[%c0_4, %c0_5, %c0_6], %4 {strides = array<i32>} : memref<2x24x8xf32, #tpu.memory_space<vmem>>, vector<2x16x8xf32>,
    %c0_7 = arith.constant 0 : index
    %c0_8 = arith.constant 0 : index
    %c0_9 = arith.constant 0 : index
    %6 = vector.load %arg7[%c0_7, %c0_8, %c0_9] : memref<2x24x8xf32, #tpu.memory_space<vmem>>, vector<2x16x8xf32>
    %c0_10 = arith.constant 0 : index
    %c0_11 = arith.constant 0 : index
    %c0_12 = arith.constant 0 : index
    %7 = vector.load %arg8[%c0_10, %c0_11, %c0_12] : memref<2x16x40xf32, #tpu.memory_space<vmem>>, vector<2x16x8xf32>
    tpu.vector_store %arg8[%c0_10, %c0_11, %c0_12], %6 {strides = array<i32>} : memref<2x16x40xf32, #tpu.memory_space<vmem>>, vector<2x16x8xf32>,
    %c0_13 = arith.constant 0 : index
    %c1 = arith.constant 1 : index
    %c0_14 = arith.constant 0 : index
    %8 = vector.load %arg7[%c0_13, %c1, %c0_14] : memref<2x24x8xf32, #tpu.memory_space<vmem>>, vector<2x16x8xf32>
    %c0_15 = arith.constant 0 : index
    %c0_16 = arith.constant 0 : index
    %c8 = arith.constant 8 : index
    %9 = vector.load %arg8[%c0_15, %c0_16, %c8] : memref<2x16x40xf32, #tpu.memory_space<vmem>>, vector<2x16x8xf32>
    tpu.vector_store %arg8[%c0_15, %c0_16, %c8], %8 {strides = array<i32>} : memref<2x16x40xf32, #tpu.memory_space<vmem>>, vector<2x16x8xf32>,
    %c0_17 = arith.constant 0 : index
    %c2 = arith.constant 2 : index
    %c0_18 = arith.constant 0 : index
    %10 = vector.load %arg7[%c0_17, %c2, %c0_18] : memref<2x24x8xf32, #tpu.memory_space<vmem>>, vector<2x16x8xf32>
    %c0_19 = arith.constant 0 : index
    %c0_20 = arith.constant 0 : index
    %c16 = arith.constant 16 : index
    %11 = vector.load %arg8[%c0_19, %c0_20, %c16] : memref<2x16x40xf32, #tpu.memory_space<vmem>>, vector<2x16x8xf32>
    tpu.vector_store %arg8[%c0_19, %c0_20, %c16], %10 {strides = array<i32>} : memref<2x16x40xf32, #tpu.memory_space<vmem>>, vector<2x16x8xf32>,
    %c0_21 = arith.constant 0 : index
    %c3 = arith.constant 3 : index
    %c0_22 = arith.constant 0 : index
    %12 = vector.load %arg7[%c0_21, %c3, %c0_22] : memref<2x24x8xf32, #tpu.memory_space<vmem>>, vector<2x16x8xf32>
    %c0_23 = arith.constant 0 : index
    %c0_24 = arith.constant 0 : index
    %c24 = arith.constant 24 : index
    %13 = vector.load %arg8[%c0_23, %c0_24, %c24] : memref<2x16x40xf32, #tpu.memory_space<vmem>>, vector<2x16x8xf32>
    tpu.vector_store %arg8[%c0_23, %c0_24, %c24], %12 {strides = array<i32>} : memref<2x16x40xf32, #tpu.memory_space<vmem>>, vector<2x16x8xf32>,
    %c0_25 = arith.constant 0 : index
    %c4 = arith.constant 4 : index
    %c0_26 = arith.constant 0 : index
    %14 = vector.load %arg7[%c0_25, %c4, %c0_26] : memref<2x24x8xf32, #tpu.memory_space<vmem>>, vector<2x16x8xf32>
    %c0_27 = arith.constant 0 : index
    %c0_28 = arith.constant 0 : index
    %c32 = arith.constant 32 : index
    %15 = vector.load %arg8[%c0_27, %c0_28, %c32] : memref<2x16x40xf32, #tpu.memory_space<vmem>>, vector<2x16x8xf32>
    tpu.vector_store %arg8[%c0_27, %c0_28, %c32], %14 {strides = array<i32>} : memref<2x16x40xf32, #tpu.memory_space<vmem>>, vector<2x16x8xf32>,
    %c0_29 = arith.constant 0 : index
    %c0_30 = arith.constant 0 : index
    %c0_31 = arith.constant 0 : index
    %16 = vector.load %arg7[%c0_29, %c0_30, %c0_31] : memref<2x24x8xf32, #tpu.memory_space<vmem>>, vector<2x8x8xf32>
    %c0_32 = arith.constant 0 : index
    %c16_33 = arith.constant 16 : index
    %c0_34 = arith.constant 0 : index
    %17 = vector.load %arg7[%c0_32, %c16_33, %c0_34] : memref<2x24x8xf32, #tpu.memory_space<vmem>>, vector<2x8x8xf32>
    tpu.vector_store %arg7[%c0_32, %c16_33, %c0_34], %16 {strides = array<i32>} : memref<2x24x8xf32, #tpu.memory_space<vmem>>, vector<2x8x8xf32>,
    %c0_35 = arith.constant 0 : index
    %c0_36 = arith.constant 0 : index
    %c0_37 = arith.constant 0 : index
    %18 = vector.load %arg8[%c0_35, %c0_36, %c0_37] : memref<2x16x40xf32, #tpu.memory_space<vmem>>, vector<2x16x40xf32>
    %c0_38 = arith.constant 0 : index
    %c0_39 = arith.constant 0 : index
    %19 = vector.load %arg3[%c0_38, %c0_39] : memref<40x128xf32, #tpu.memory_space<vmem>>, vector<40x128xf32>
    %cst = arith.constant dense<0.000000e+00> : vector<2x16x128xf32>
    %20 = tpu.matmul %18, %19, %cst {dimension_numbers = #tpu.dot_dimension_numbers<[2], [0], [0, 1], [1], [0, 0, 0, 1, 1, 1], [], []>} : vector<2x16x40xf32>, vector<40x128xf32>, vector<2x16x128xf32> -> vector<2x16x128xf32>
    %c1_i32 = arith.constant 1 : i32
    %21 = arith.addi %0, %c1_i32 : i32
    %c16_i32 = arith.constant 16 : i32
    %22 = arith.muli %21, %c16_i32 : i32
    %c12_i32 = arith.constant 12 : i32
    %23 = arith.cmpi sgt, %22, %c12_i32 : i32
    %24 = arith.extui %23 : i1 to i32
    %c0_i32_40 = arith.constant 0 : i32
    %25 = arith.cmpi ne, %24, %c0_i32_40 : i32
    scf.if %25 {
      %c16_i32_44 = arith.constant 16 : i32
      %32 = arith.muli %0, %c16_i32_44 : i32
      %33 = tpu.iota {dimensions = array<i32: 0>} : vector<16x128xi32>
      %34 = vector.broadcast %32 : i32 to vector<16x128xi32>
      %35 = arith.addi %34, %33 : vector<16x128xi32>
      %c0_45 = arith.constant 0 : index
      %c0_46 = arith.constant 0 : index
      %36 = vector.load %arg5[%c0_45, %c0_46] : memref<1x128xi32, #tpu.memory_space<vmem>>, vector<1x128xi32>
      %37 = vector.broadcast %36 : vector<1x128xi32> to vector<16x128xi32>
      %38 = arith.addi %35, %37 : vector<16x128xi32>
      %c16_i32_47 = arith.constant 16 : i32
      %39 = vector.broadcast %c16_i32_47 : i32 to vector<16x128xi32>
      %40 = arith.cmpi sle, %38, %39 : vector<16x128xi32>
      %c0_48 = arith.constant 0 : index
      %c0_49 = arith.constant 0 : index
      %41 = vector.load %arg9[%c0_48, %c0_49] : memref<2x128xf32, #tpu.memory_space<vmem>>, vector<2x128xf32>
      %42 = vector.shape_cast %40 : vector<16x128xi1> to vector<1x16x128xi1>
      %cst_50 = arith.constant -1.000000e+30 : f32
      %43 = vector.shape_cast %42 : vector<1x16x128xi1> to vector<1x16x128xi1>
      %44 = vector.broadcast %43 : vector<1x16x128xi1> to vector<2x16x128xi1>
      %45 = vector.broadcast %cst_50 : f32 to vector<2x16x128xf32>
      %46 = arith.select %44, %20, %45 : vector<2x16x128xi1>, vector<2x16x128xf32>
      %cst_51 = arith.constant dense<0xFF800000> : vector<2x128xf32>
      %47 = vector.multi_reduction <maximumf>, %46, %cst_51 [1] : vector<2x16x128xf32> to vector<2x128xf32>
      %48 = arith.maximumf %41, %47 : vector<2x128xf32>
      %c0_52 = arith.constant 0 : index
      %c0_53 = arith.constant 0 : index
      %49 = vector.load %arg9[%c0_52, %c0_53] : memref<2x128xf32, #tpu.memory_space<vmem>>, vector<2x128xf32>
      tpu.vector_store %arg9[%c0_52, %c0_53], %48 {strides = array<i32>} : memref<2x128xf32, #tpu.memory_space<vmem>>, vector<2x128xf32>,
    } else {
    }
    %true = arith.constant true
    %26 = arith.xori %23, %true : i1
    %27 = arith.extui %26 : i1 to i32
    %c0_i32_41 = arith.constant 0 : i32
    %28 = arith.cmpi ne, %27, %c0_i32_41 : i32
    scf.if %28 {
      %c0_44 = arith.constant 0 : index
      %c0_45 = arith.constant 0 : index
      %32 = vector.load %arg9[%c0_44, %c0_45] : memref<2x128xf32, #tpu.memory_space<vmem>>, vector<2x128xf32>
      %cst_46 = arith.constant dense<0xFF800000> : vector<2x128xf32>
      %33 = vector.multi_reduction <maximumf>, %20, %cst_46 [1] : vector<2x16x128xf32> to vector<2x128xf32>
      %34 = arith.maximumf %32, %33 : vector<2x128xf32>
      %c0_47 = arith.constant 0 : index
      %c0_48 = arith.constant 0 : index
      %35 = vector.load %arg9[%c0_47, %c0_48] : memref<2x128xf32, #tpu.memory_space<vmem>>, vector<2x128xf32>
      tpu.vector_store %arg9[%c0_47, %c0_48], %34 {strides = array<i32>} : memref<2x128xf32, #tpu.memory_space<vmem>>, vector<2x128xf32>,
    } else {
    }
    %c0_i32_42 = arith.constant 0 : i32
    %29 = arith.cmpi eq, %arg1, %c0_i32_42 : i32
    %30 = arith.extui %29 : i1 to i32
    %c0_i32_43 = arith.constant 0 : i32
    %31 = arith.cmpi ne, %30, %c0_i32_43 : i32
    scf.if %31 {
      %c0_44 = arith.constant 0 : index
      %c0_45 = arith.constant 0 : index
      %32 = vector.load %arg9[%c0_44, %c0_45] : memref<2x128xf32, #tpu.memory_space<vmem>>, vector<2x128xf32>
      %c0_46 = arith.constant 0 : index
      %c0_47 = arith.constant 0 : index
      %33 = vector.load %arg4[%c0_46, %c0_47] : memref<1x128xf32, #tpu.memory_space<vmem>>, vector<1x128xf32>
      %34 = vector.broadcast %33 : vector<1x128xf32> to vector<2x128xf32>
      %35 = arith.addf %32, %34 : vector<2x128xf32>
      %cst_48 = arith.constant 0.000000e+00 : f32
      %36 = vector.broadcast %cst_48 : f32 to vector<2x128xf32>
      %37 = arith.maximumf %35, %36 : vector<2x128xf32>
      %c0_49 = arith.constant 0 : index
      %c0_50 = arith.constant 0 : index
      %38 = vector.load %arg6[%c0_49, %c0_50] : memref<2x128xf32, #tpu.memory_space<vmem>>, vector<2x128xf32>
      tpu.vector_store %arg6[%c0_49, %c0_50], %37 {strides = array<i32>} : memref<2x128xf32, #tpu.memory_space<vmem>>, vector<2x128xf32>,
    } else {
    }
    return
  }
  func.func @transform_0(%arg0: i32, %arg1: i32) -> (i32, i32, i32) {
    %c0_i32 = arith.constant 0 : i32
    %0 = arith.subi %c0_i32, %arg1 : i32
    %c0_i32_0 = arith.constant 0 : i32
    %c0_i32_1 = arith.constant 0 : i32
    return %arg0, %0, %c0_i32_0 : i32, i32, i32
  }
  func.func @transform_1(%arg0: i32, %arg1: i32) -> (i32, i32) {
    %c0_i32 = arith.constant 0 : i32
    %c0_i32_0 = arith.constant 0 : i32
    %c0_i32_1 = arith.constant 0 : i32
    return %c0_i32, %c0_i32_0 : i32, i32
  }
  func.func @transform_2(%arg0: i32, %arg1: i32) -> (i32, i32) {
    %c0_i32 = arith.constant 0 : i32
    %c0_i32_0 = arith.constant 0 : i32
    %c0_i32_1 = arith.constant 0 : i32
    return %c0_i32, %c0_i32_0 : i32, i32
  }
  func.func @transform_3(%arg0: i32, %arg1: i32) -> (i32, i32) {
    %c0_i32 = arith.constant 0 : i32
    %c0_i32_0 = arith.constant 0 : i32
    %c0_i32_1 = arith.constant 0 : i32
    return %c0_i32, %c0_i32_0 : i32, i32
  }
  func.func @transform_4(%arg0: i32, %arg1: i32) -> (i32, i32) {
    %c0_i32 = arith.constant 0 : i32
    %c0_i32_0 = arith.constant 0 : i32
    return %arg0, %c0_i32 : i32, i32
  }
}

</mosaic_0001>

<llo_original>
// kernel: tpu_custom_call.1
$region0: #{tpu_custom_call.1}
  #allocation0 [shape = 'u32[]', space=smem, size = 0x4, offset = 0x4, fixed_abs, tag = 'smem constant byte address 0x4 - core index']
  #allocation1 [shape = 'u32[144,128]{1,0:T(1,128)}', space=vmem, size = 0x12000, scoped, tag = 'internal scratch']
  #allocation2 [shape = 'f32[2,24,8]{2,1,0:T(8,128)}', space=vmem, size = 0x6000, scoped, tag = 'scratch operand']
  #allocation3 [shape = 'f32[2,16,40]{2,1,0:T(8,128)}', space=vmem, size = 0x4000, scoped, tag = 'scratch operand']
  #allocation4 [shape = 'f32[2,128]{1,0:T(2,128)}', space=vmem, size = 0x400, scoped, tag = 'scratch operand']
  %s0 = inlined_call_operand.vmem [shape: f32[2,16,8], index: 0, kind: input, shape index: {}]
  %s1 = inlined_call_operand.vmem [shape: f32[40,128], index: 1, kind: input, shape index: {}]
  %s2 = inlined_call_operand.vmem [shape: f32[1,128], index: 2, kind: input, shape index: {}]
  %s3 = inlined_call_operand.vmem [shape: s32[1,128], index: 3, kind: input, shape index: {}]
  %s4 = inlined_call_operand.hbm [shape: f32[2,128], index: 4, kind: output, shape index: {}]
  %s5 = sld [smem:[#allocation0]]
  $region42: #{tpu_custom_call.1} parent=0
    _
  %s7 = ssub.s32 1, %s5
  %s8 = scalar_select 0, %s7, %s5
  $region1: #{tpu_custom_call.1} parent=0
    #allocation5 [shape = 'u8[1024]{0}', space=vmem, size = 0x400, scoped, tag = 'output window, operand 0, single buffered']
    #allocation6 [shape = 's32[1]{0}', space=sflag, size = 0x4, scoped, tag = 'scoped memory for tpu_custom_call.1']
    %9 = vsyncpa [#allocation6], 0
    // Predicated region
    $region2: #{tpu_custom_call.1} parent=1 // pred_check
      _
    $region3: #{tpu_custom_call.1} parent=1 // pred_check_branch
      %11 = sbr.rel (0) target = $region5
    $region4: #{tpu_custom_call.1} parent=1 // pred_region
      %s12 = ssub.s32 0, 0
      %s13 = smul.u32 2, %s12
      %p14 = scmp.lt.s32.totalorder %s13, 1
      %s15 = scalar_select %p14, %s13, 1
      %s16 = smul.addr %s15, 8
      %s17 = scalar_lea.vmem %s0, %s16
      %s18 = ssub.s32 0, 0
      %s19 = smul.u32 2, %s18
    $region5: #{tpu_custom_call.1} parent=1 // pred_fallthru
      _
    // Predicated region
    $region6: #{tpu_custom_call.1} parent=1 // pred_check
      _
    $region7: #{tpu_custom_call.1} parent=1 // pred_check_branch
      %21 = sbr.rel (0) target = $region9
    $region8: #{tpu_custom_call.1} parent=1 // pred_region
      _
    $region9: #{tpu_custom_call.1} parent=1 // pred_fallthru
      _
    // Predicated region
    $region10: #{tpu_custom_call.1} parent=1 // pred_check
      _
    $region11: #{tpu_custom_call.1} parent=1 // pred_check_branch
      %23 = sbr.rel (0) target = $region13
    $region12: #{tpu_custom_call.1} parent=1 // pred_region
      _
    $region13: #{tpu_custom_call.1} parent=1 // pred_fallthru
      _
    // Predicated region
    $region14: #{tpu_custom_call.1} parent=1 // pred_check
      _
    $region15: #{tpu_custom_call.1} parent=1 // pred_check_branch
      %25 = sbr.rel (0) target = $region17
    $region16: #{tpu_custom_call.1} parent=1 // pred_region
      _
    $region17: #{tpu_custom_call.1} parent=1 // pred_fallthru
      _
    %s26 = ssub.s32 0, 0
    %s27 = smul.u32 2, %s26
    %p28 = scmp.lt.s32.totalorder %s27, 1
    %s29 = scalar_select %p28, %s27, 1
    %s30 = smul.addr %s29, 8
    %s31 = scalar_lea.vmem %s0, %s30
    %s32 = ssub.s32 0, 0
    %s33 = smul.u32 2, %s32
    %p34 = scmp.lt.s32.totalorder %s33, 1
    %s35 = scalar_select %p34, %s33, 1
    %s36 = smul.addr %s35, 8
    %s37 = scalar_lea.vmem %s0, %s36
    %s38 = ssub.s32 0, 0
    %s39 = smul.u32 2, %s38
    %s40 = ssub.s32 0, 0
    %p41 = scmp.eq.s32.totalorder 0, 0
    // Predicated region
    $region18: #{tpu_custom_call.1} parent=1 // pred_check
      %p42 = pneg %p41
    $region19: #{tpu_custom_call.1} parent=1 // pred_check_branch
      %44 = sbr.rel (%p42) target = $region21
    $region20: #{tpu_custom_call.1} parent=1 // pred_region
      %45 = vst [vmem:[#allocation4] sm:$0x3] -1e+30
      %vm46 = vcmask 64512
      %47 = vst.msk [vmem:[#allocation2 + $0x10] sm:$0xff] %vm46, 0.0
      %48 = vst.msk [vmem:[#allocation2 + $0x28] sm:$0xff] %vm46, 0.0
    $region21: #{tpu_custom_call.1} parent=1 // pred_fallthru
      _
    %v49 = vld [vmem:[%s37] sm:$0xff]
    %v50 = vld [vmem:[%s37 + $0x8] sm:$0xff]
    %v51 = vld [vmem:[%s37 + $0x10] sm:$0xff]
    %v52 = vld [vmem:[%s37 + $0x18] sm:$0xff]
    %vm53 = vcmask 64512
    %54 = vst.msk [vmem:[#allocation2] sm:$0xff] %vm53, %v49
    %55 = vst.msk [vmem:[#allocation2 + $0x8] sm:$0xff] %vm53, %v50
    %56 = vst.msk [vmem:[#allocation2 + $0x18] sm:$0xff] %vm53, %v51
    %57 = vst.msk [vmem:[#allocation2 + $0x20] sm:$0xff] %vm53, %v52
    %v58 = vld [vmem:[#allocation2] sm:$0xff]
    %v59 = vld [vmem:[#allocation2 + $0x8] sm:$0xff]
    %v60 = vld [vmem:[#allocation2 + $0x18] sm:$0xff]
    %v61 = vld [vmem:[#allocation2 + $0x20] sm:$0xff]
    %62 = vst.msk [vmem:[#allocation3] sm:$0xff] %vm53, %v58
    %63 = vst.msk [vmem:[#allocation3 + $0x8] sm:$0xff] %vm53, %v59
    %64 = vst.msk [vmem:[#allocation3 + $0x10] sm:$0xff] %vm53, %v60
    %65 = vst.msk [vmem:[#allocation3 + $0x18] sm:$0xff] %vm53, %v61
    %v66 = vld [vmem:[#allocation2 + $0x1] sm:$0xff]
    %v67 = vld [vmem:[#allocation2 + $0x9] sm:$0xff]
    %v68 = vld [vmem:[#allocation2 + $0x19] sm:$0xff]
    %v69 = vld [vmem:[#allocation2 + $0x21] sm:$0xff]
    %74 = vrot.lane.b32.xlu0 %v66, 8
    %v75 = vpop.permute.xlu0 %74
    %76 = vrot.lane.b32.xlu0 %v67, 8
    %v77 = vpop.permute.xlu0 %76
    %78 = vrot.lane.b32.xlu0 %v68, 8
    %v79 = vpop.permute.xlu0 %78
    %80 = vrot.lane.b32.xlu0 %v69, 8
    %v81 = vpop.permute.xlu0 %80
    %vm86 = vcmask 130112
    %87 = vst.msk [vmem:[#allocation3] sm:$0xff] %vm86, %v75
    %88 = vst.msk [vmem:[#allocation3 + $0x8] sm:$0xff] %vm86, %v77
    %89 = vst.msk [vmem:[#allocation3 + $0x10] sm:$0xff] %vm86, %v79
    %90 = vst.msk [vmem:[#allocation3 + $0x18] sm:$0xff] %vm86, %v81
    %v91 = vld [vmem:[#allocation2 + $0x2] sm:$0xff]
    %v92 = vld [vmem:[#allocation2 + $0xa] sm:$0xff]
    %v93 = vld [vmem:[#allocation2 + $0x1a] sm:$0xff]
    %v94 = vld [vmem:[#allocation2 + $0x22] sm:$0xff]
    %99 = vrot.lane.b32.xlu0 %v91, 16
    %v100 = vpop.permute.xlu0 %99
    %101 = vrot.lane.b32.xlu0 %v92, 16
    %v102 = vpop.permute.xlu0 %101
    %103 = vrot.lane.b32.xlu0 %v93, 16
    %v104 = vpop.permute.xlu0 %103
    %105 = vrot.lane.b32.xlu0 %v94, 16
    %v106 = vpop.permute.xlu0 %105
    %vm111 = vcmask 195712
    %112 = vst.msk [vmem:[#allocation3] sm:$0xff] %vm111, %v100
    %113 = vst.msk [vmem:[#allocation3 + $0x8] sm:$0xff] %vm111, %v102
    %114 = vst.msk [vmem:[#allocation3 + $0x10] sm:$0xff] %vm111, %v104
    %115 = vst.msk [vmem:[#allocation3 + $0x18] sm:$0xff] %vm111, %v106
    %v116 = vld [vmem:[#allocation2 + $0x3] sm:$0xff]
    %v117 = vld [vmem:[#allocation2 + $0xb] sm:$0xff]
    %v118 = vld [vmem:[#allocation2 + $0x1b] sm:$0xff]
    %v119 = vld [vmem:[#allocation2 + $0x23] sm:$0xff]
    %124 = vrot.lane.b32.xlu0 %v116, 24
    %v125 = vpop.permute.xlu0 %124
    %126 = vrot.lane.b32.xlu0 %v117, 24
    %v127 = vpop.permute.xlu0 %126
    %128 = vrot.lane.b32.xlu0 %v118, 24
    %v129 = vpop.permute.xlu0 %128
    %130 = vrot.lane.b32.xlu0 %v119, 24
    %v131 = vpop.permute.xlu0 %130
    %vm136 = vcmask 261312
    %137 = vst.msk [vmem:[#allocation3] sm:$0xff] %vm136, %v125
    %138 = vst.msk [vmem:[#allocation3 + $0x8] sm:$0xff] %vm136, %v127
    %139 = vst.msk [vmem:[#allocation3 + $0x10] sm:$0xff] %vm136, %v129
    %140 = vst.msk [vmem:[#allocation3 + $0x18] sm:$0xff] %vm136, %v131
    %v141 = vld [vmem:[#allocation2 + $0x4] sm:$0xff]
    %v142 = vld [vmem:[#allocation2 + $0xc] sm:$0xff]
    %v143 = vld [vmem:[#allocation2 + $0x1c] sm:$0xff]
    %v144 = vld [vmem:[#allocation2 + $0x24] sm:$0xff]
    %149 = vrot.lane.b32.xlu0 %v141, 32
    %v150 = vpop.permute.xlu0 %149
    %151 = vrot.lane.b32.xlu0 %v142, 32
    %v152 = vpop.permute.xlu0 %151
    %153 = vrot.lane.b32.xlu0 %v143, 32
    %v154 = vpop.permute.xlu0 %153
    %155 = vrot.lane.b32.xlu0 %v144, 32
    %v156 = vpop.permute.xlu0 %155
    %vm161 = vcmask 326912
    %162 = vst.msk [vmem:[#allocation3] sm:$0xff] %vm161, %v150
    %163 = vst.msk [vmem:[#allocation3 + $0x8] sm:$0xff] %vm161, %v152
    %164 = vst.msk [vmem:[#allocation3 + $0x10] sm:$0xff] %vm161, %v154
    %165 = vst.msk [vmem:[#allocation3 + $0x18] sm:$0xff] %vm161, %v156
    %v166 = vld [vmem:[#allocation2] sm:$0xff]
    %v167 = vld [vmem:[#allocation2 + $0x18] sm:$0xff]
    %168 = vst.msk [vmem:[#allocation2 + $0x10] sm:$0xff] %vm53, %v166
    %169 = vst.msk [vmem:[#allocation2 + $0x28] sm:$0xff] %vm53, %v167
    %v170 = vld [vmem:[#allocation3] sm:$0xff]
    %v171 = vld [vmem:[#allocation3 + $0x8] sm:$0xff]
    %v172 = vld [vmem:[#allocation3 + $0x10] sm:$0xff]
    %v173 = vld [vmem:[#allocation3 + $0x18] sm:$0xff]
    %v174 = vld [vmem:[%s1] sm:$0xff]
    %v175 = vld [vmem:[%s1 + $0x8] sm:$0xff]
    %v176 = vld [vmem:[%s1 + $0x10] sm:$0xff]
    %v177 = vld [vmem:[%s1 + $0x18] sm:$0xff]
    %v178 = vld [vmem:[%s1 + $0x20] sm:$0xff]
    %vm179 = vcmask 326656
    %v181 = vsel %vm179, %v170, 0
    %v184 = vsel %vm179, %v171, 0
    %v187 = vsel %vm179, %v172, 0
    %v190 = vsel %vm179, %v173, 0
    %192 = vmatprep.subr.mxu0 0.0
    %193 = vmatpush1.msra.mxu0 %v174
    %194 = vmatprep.subr.mxu0 0.0
    %195 = vmatpush1.msra.mxu0 %v175
    %196 = vmatprep.subr.mxu0 0.0
    %197 = vmatpush1.msra.mxu0 %v176
    %198 = vmatprep.subr.mxu0 0.0
    %199 = vmatpush1.msra.mxu0 %v177
    %200 = vmatprep.subr.mxu0 0.0
    %201 = vmatpush1.msra.mxu0 %v178
    %202 = vmatprep.subr.mxu0 0.0
    %203 = vmatpush1.msra.mxu0 0.0
    %204 = vmatprep.subr.mxu0 0.0
    %205 = vmatpush1.msra.mxu0 0.0
    %206 = vmatprep.subr.mxu0 0.0
    %207 = vmatpush1.msra.mxu0 0.0
    %208 = vmatprep.subr.mxu0 0.0
    %209 = vmatpush1.msra.mxu0 0.0
    %210 = vmatprep.subr.mxu0 0.0
    %211 = vmatpush1.msra.mxu0 0.0
    %212 = vmatprep.subr.mxu0 0.0
    %213 = vmatpush1.msra.mxu0 0.0
    %214 = vmatprep.subr.mxu0 0.0
    %215 = vmatpush1.msra.mxu0 0.0
    %216 = vmatprep.subr.mxu0 0.0
    %217 = vmatpush1.msra.mxu0 0.0
    %218 = vmatprep.subr.mxu0 0.0
    %219 = vmatpush1.msra.mxu0 0.0
    %220 = vmatprep.subr.mxu0 0.0
    %221 = vmatpush1.msra.mxu0 0.0
    %222 = vmatprep.subr.mxu0 0.0
    %223 = vmatpush1.msra.mxu0 0.0
    %224 = vmatprep.subr.mxu0 0.0
    %225 = vmatpush1.msra.mxu0 0.0
    %226 = vmatprep.subr.mxu0 0.0
    %227 = vmatpush1.msra.mxu0 0.0
    %228 = vmatprep.subr.mxu0 0.0
    %229 = vmatpush1.msra.mxu0 0.0
    %230 = vmatprep.subr.mxu0 0.0
    %231 = vmatpush1.msra.mxu0 0.0
    %232 = vmatprep.subr.mxu0 0.0
    %233 = vmatpush1.msra.mxu0 0.0
    %234 = vmatprep.subr.mxu0 0.0
    %235 = vmatpush1.msra.mxu0 0.0
    %236 = vmatprep.subr.mxu0 0.0
    %237 = vmatpush1.msra.mxu0 0.0
    %238 = vmatprep.subr.mxu0 0.0
    %239 = vmatpush1.msra.mxu0 0.0
    %240 = vmatprep.subr.mxu0 0.0
    %241 = vmatpush1.msra.mxu0 0.0
    %242 = vmatprep.subr.mxu0 0.0
    %243 = vmatpush1.msra.mxu0 0.0
    %244 = vmatprep.subr.mxu0 0.0
    %245 = vmatpush1.msra.mxu0 0.0
    %246 = vmatprep.subr.mxu0 0.0
    %247 = vmatpush1.msra.mxu0 0.0
    %248 = vmatprep.subr.mxu0 0.0
    %249 = vmatpush1.msra.mxu0 0.0
    %250 = vmatprep.subr.mxu0 0.0
    %251 = vmatpush1.msra.mxu0 0.0
    %252 = vmatprep.subr.mxu0 0.0
    %253 = vmatpush1.msra.mxu0 0.0
    %254 = vmatprep.subr.mxu0 0.0
    %255 = vmatpush1.msra.mxu0 0.0
    %256 = vmatprep.mubr.f32.mxu0 0.0
    %257 = vmatmul.mubr.f32.gmra.mrb[0].mxu0 %v181
    %v258 = vpop.f32.mrb[0].mxu0
    %v259 = vadd.f32 0.0, %v258
    %v260 = vpop.f32.mrb[0].mxu0
    %261 = vmatprep.mubr.f32.mxu0 0.0
    %262 = vmatmul.mubr.f32.gmra.mrb[0].mxu0 %v184
    %v263 = vpop.f32.mrb[0].mxu0
    %v264 = vadd.f32 0.0, %v263
    %v265 = vpop.f32.mrb[0].mxu0
    %266 = vmatprep.mubr.f32.mxu0 0.0
    %267 = vmatmul.mubr.f32.gmra.mrb[0].mxu0 %v187
    %v268 = vpop.f32.mrb[0].mxu0
    %v269 = vadd.f32 0.0, %v268
    %v270 = vpop.f32.mrb[0].mxu0
    %271 = vmatprep.mubr.f32.mxu0 0.0
    %272 = vmatmul.mubr.f32.gmra.mrb[0].mxu0 %v190
    %v273 = vpop.f32.mrb[0].mxu0
    %v274 = vadd.f32 0.0, %v273
    %v275 = vpop.f32.mrb[0].mxu0
    %276 = vdwg.mxu0
    %s277 = ssub.s32 1, 0
    %s278 = smul.u32 %s277, 16
    %p279 = scmp.gt.s32.totalorder %s278, 12
    // Predicated region
    $region22: #{tpu_custom_call.1} parent=1 // pred_check
      %p280 = pneg %p279
    $region23: #{tpu_custom_call.1} parent=1 // pred_check_branch
      %282 = sbr.rel (%p280) target = $region25
    $region24: #{tpu_custom_call.1} parent=1 // pred_region
      %s283 = smul.u32 %s40, 16
      %v284 = vlaneseq
      %v285 = vshrl.u32 %v284, 7
      %v286 = vadd.s32 %v285, 8
      %v287 = vstv %s283
      %v288 = vadd.s32 %v287, %v285
      %v289 = vadd.s32 %v287, %v286
      %v290 = vld [vmem:[%s3] sm:$0x1]
      %v291 = vlaneseq
      %v292 = vshrl.u32 %v291, 7
      %v293 = vsub.s32 0, %v292
      %v294 = vrot.slane %v290, %v293
      %v295 = vadd.s32 %v288, %v294
      %v296 = vadd.s32 %v289, %v294
      %vm297 = vcmp.le.s32.totalorder %v295, 16
      %vm298 = vcmp.le.s32.totalorder %v296, 16
      %v299 = vld [vmem:[#allocation4] sm:$0x3]
      %v300 = vsel %vm297, 1, 0
      %v301 = vsel %vm298, 1, 0
      %vm302 = vcmp.eq.s32.totalorder %v300, 1
      %vm303 = vcmp.eq.s32.totalorder %v301, 1
      %v304 = vsel %vm302, %v259, -1e+30
      %v305 = vsel %vm303, %v264, -1e+30
      %v306 = vsel %vm302, %v269, -1e+30
      %v307 = vsel %vm303, %v274, -1e+30
      %v308 = vmax.f32 %v304, %v305
      %v309 = vrot.slane %v308, 4
      %v310 = vmax.f32 %v308, %v309
      %v311 = vrot.slane %v310, 2
      %v312 = vmax.f32 %v310, %v311
      %v313 = vrot.slane %v312, 1
      %v314 = vmax.f32 %v312, %v313
      %v315 = vmax.f32 %v306, %v307
      %v316 = vrot.slane %v315, 4
      %v317 = vmax.f32 %v315, %v316
      %v318 = vrot.slane %v317, 2
      %v319 = vmax.f32 %v317, %v318
      %v320 = vrot.slane %v319, 1
      %v321 = vmax.f32 %v319, %v320
      %vm324 = vcmask 1041409
      %v325 = vsel %vm324, %v321, %v314
      %v327 = vmax.f32 %v299, %v325
      %328 = vst [vmem:[#allocation4] sm:$0x3] %v327
    $region25: #{tpu_custom_call.1} parent=1 // pred_fallthru
      _
    %p329 = scmp.le.s32.totalorder %s278, 12
    // Predicated region
    $region26: #{tpu_custom_call.1} parent=1 // pred_check
      %p330 = pneg %p329
    $region27: #{tpu_custom_call.1} parent=1 // pred_check_branch
      %332 = sbr.rel (%p330) target = $region29
    $region28: #{tpu_custom_call.1} parent=1 // pred_region
      %v333 = vld [vmem:[#allocation4] sm:$0x3]
      %v334 = vmax.f32 %v259, %v264
      %v335 = vrot.slane %v334, 4
      %v336 = vmax.f32 %v334, %v335
      %v337 = vrot.slane %v336, 2
      %v338 = vmax.f32 %v336, %v337
      %v339 = vrot.slane %v338, 1
      %v340 = vmax.f32 %v338, %v339
      %v341 = vmax.f32 %v269, %v274
      %v342 = vrot.slane %v341, 4
      %v343 = vmax.f32 %v341, %v342
      %v344 = vrot.slane %v343, 2
      %v345 = vmax.f32 %v343, %v344
      %v346 = vrot.slane %v345, 1
      %v347 = vmax.f32 %v345, %v346
      %vm350 = vcmask 1041409
      %v351 = vsel %vm350, %v347, %v340
      %v353 = vmax.f32 %v333, %v351
      %354 = vst [vmem:[#allocation4] sm:$0x3] %v353
    $region29: #{tpu_custom_call.1} parent=1 // pred_fallthru
      _
    // Predicated region
    $region30: #{tpu_custom_call.1} parent=1 // pred_check
      %p355 = pneg %p41
    $region31: #{tpu_custom_call.1} parent=1 // pred_check_branch
      %357 = sbr.rel (%p355) target = $region33
    $region32: #{tpu_custom_call.1} parent=1 // pred_region
      %v358 = vld [vmem:[#allocation4] sm:$0x3]
      %v359 = vld [vmem:[%s2] sm:$0x1]
      %v361 = vlaneseq
      %v362 = vshrl.u32 %v361, 7
      %v363 = vsub.s32 0, %v362
      %v364 = vrot.slane %v359, %v363
      %v366 = vadd.f32 %v358, %v364
      %v367 = vmax.f32 %v366, 0.0
      %368 = vst [vmem:[#allocation5] sm:$0x3] %v367
    $region33: #{tpu_custom_call.1} parent=1 // pred_fallthru
      _
    // Predicated region
    $region34: #{tpu_custom_call.1} parent=1 // pred_check
      _
    $region35: #{tpu_custom_call.1} parent=1 // pred_check_branch
      %370 = sbr.rel (0) target = $region37
    $region36: #{tpu_custom_call.1} parent=1 // pred_region
      %s372 = ssub.s32 32, 32
      %373 = vsyncadd [#allocation6], %s372
      %s375 = sshll.u32 [#allocation5], 4
      %s376 = int_to_ptr.vmem [resolvable:$true] %s375
      %378 = dma.vmem_to_hbm [thread:$0]  %s376, 32, %s4, [#allocation6]
    $region37: #{tpu_custom_call.1} parent=1 // pred_fallthru
      _
    // Predicated region
    $region38: #{tpu_custom_call.1} parent=1 // pred_check
      _
    $region39: #{tpu_custom_call.1} parent=1 // pred_check_branch
      %380 = sbr.rel (0) target = $region41
    $region40: #{tpu_custom_call.1} parent=1 // pred_region
      %381 = dma.done [#allocation6], 32
    $region41: #{tpu_custom_call.1} parent=1 // pred_fallthru
      _
    %382 = vsyncpa [#allocation6], 1

</llo_original>
